<compile_context>
chip_gen: v5e
topology: v5e:2x2
jax: 0.10.0
libtpu: 0.0.40
codegen_flags: <defaults>
</compile_context>

<pallas_src>
from dataclasses import dataclass
from typing import Optional

import jax
import jax.numpy as jnp
from jax.experimental import pallas as pl
from jax.experimental.pallas import tpu as pltpu


@dataclass
class KVCache:
    key_states: jnp.ndarray
    value_states: jnp.ndarray
    sequence_ids: jnp.ndarray


# ----------------------------------------------------------------------------
# Kernel
# ----------------------------------------------------------------------------
def _kv_proj_kernel(x_ref, wk_ref, wv_ref, bk_ref, bv_ref, k_ref, v_ref):
    """k = x @ wk + bk ; v = x @ wv + bv  (f32 MXU accumulate, f32 bias add)."""
    x = x_ref[...]
    k = jnp.dot(x, wk_ref[...], preferred_element_type=jnp.float32)
    v = jnp.dot(x, wv_ref[...], preferred_element_type=jnp.float32)
    k_ref[...] = (k + bk_ref[...].astype(jnp.float32)).astype(k_ref.dtype)
    v_ref[...] = (v + bv_ref[...].astype(jnp.float32)).astype(v_ref.dtype)


# ----------------------------------------------------------------------------
# Wrapper
# ----------------------------------------------------------------------------
_VMEM_BUDGET_BYTES = 48 * 1024 * 1024   # conservative: fits v7x's 64 MiB / TC
_TILE_CANDIDATES = (2048, 1024, 512, 256, 128, 64, 32, 16, 8)


def _round_up(a, b):
    return -(-a // b) * b


def kv_projection(x2d, wk, wv, bk, bv, *, out_dtype=None, block_m=None,
                  min_row_blocks=1):
    """x2d: [M, H]; wk/wv: [H, H]; bk/bv: [1, H]  ->  (k [M, H], v [M, H])."""
    M, H = x2d.shape
    out_dtype = out_dtype if out_dtype is not None else x2d.dtype

    x_b = x2d.dtype.itemsize
    w_b = wk.dtype.itemsize
    b_b = bk.dtype.itemsize
    o_b = jnp.dtype(out_dtype).itemsize

    # VMEM accounting.  Resident (constant index_map) weights/bias are counted
    # double-buffered (worst case; Buffered(1) below halves it when accepted).
    # TODO(synk): for very large H (resident weights alone near the budget), add a second grid axis over the output N dimension instead of shrinking block_m.
    resident_bytes = 2 * (2 * H * H * w_b + 2 * H * b_b)
    per_row_bytes = 2 * H * x_b + 2 * 2 * H * o_b   # x tile + two out tiles, 2x buffered

    if block_m is None:
        avail = _VMEM_BUDGET_BYTES - resident_bytes
        budget_rows = max(8, avail // per_row_bytes) if avail > 0 else 8
        large_tile = next((t for t in _TILE_CANDIDATES if t <= budget_rows), 8)
        if M <= large_tile * min_row_blocks:
            # Small/medium M: one row block per TensorCore (v7x: 2, else 1),
            # never splitting below 8-row blocks.
            n_blocks = min_row_blocks if M >= 8 * min_row_blocks else 1
            block_m = M if n_blocks == 1 else _round_up(pl.cdiv(M, n_blocks), 8)
        else:
            # Large M: stream rows with the biggest tile the VMEM budget allows
            # (>=85% of HBM roofline measured at 512+ row tiles).
            block_m = large_tile

    grid_m = pl.cdiv(M, block_m)

    vmem_limit = int(resident_bytes + block_m * per_row_bytes + (4 << 20))
    vmem_limit = min(max(vmem_limit, 32 << 20), 128 << 20)

    cost = pl.CostEstimate(
        flops=4 * M * H * H,                 # two M x H x H matmuls
        transcendentals=0,
        bytes_accessed=int(M * H * x_b + 2 * H * H * w_b + 2 * H * b_b
                           + 2 * M * H * o_b),
    )

    x_spec = pl.BlockSpec((block_m, H), lambda i: (i, 0))        # streamed rows
    out_spec = pl.BlockSpec((block_m, H), lambda i: (i, 0))
    out_shape = (jax.ShapeDtypeStruct((M, H), out_dtype),
                 jax.ShapeDtypeStruct((M, H), out_dtype))
    compiler_params = pltpu.CompilerParams(
        dimension_semantics=("parallel",),   # megacore row-sharding on v7x
        vmem_limit_bytes=vmem_limit,
    )

    def build(weight_pipeline_mode):
        kwargs = ({} if weight_pipeline_mode is None
                  else {"pipeline_mode": weight_pipeline_mode})
        w_spec = pl.BlockSpec((H, H), lambda i: (0, 0), **kwargs)   # resident
        b_spec = pl.BlockSpec((1, H), lambda i: (0, 0), **kwargs)   # resident
        return pl.pallas_call(
            _kv_proj_kernel,
            out_shape=out_shape,
            grid_spec=pltpu.PrefetchScalarGridSpec(
                num_scalar_prefetch=0,
                grid=(grid_m,),
                in_specs=[x_spec, w_spec, w_spec, b_spec, b_spec],
                out_specs=[out_spec, out_spec],
            ),
            compiler_params=compiler_params,
            cost_estimate=cost,
        )

    try:
        # Constant blocks need no double buffer: single-buffer weights/bias.
        k2d, v2d = build(pl.Buffered(1))(x2d, wk, wv, bk, bv)
    except Exception:
        # pipeline_mode / Buffered(1) not supported by this jax build.
        k2d, v2d = build(None)(x2d, wk, wv, bk, bv)
    return k2d, v2d


# ----------------------------------------------------------------------------
# Module
# ----------------------------------------------------------------------------
def _device_kind():
    try:
        return jax.devices()[0].device_kind.lower()
    except Exception:
        return ""


def _default_min_row_blocks():
    # v7x has 2 TensorCores per chip: split medium-M work into >=2 row blocks
    # so ("parallel",) shards it.  v5e/v6e have 1 TC -> single step is best.
    return 2 if "v7" in _device_kind() else 1


def _default_matmul_dtype():
    # bf16-native MXUs (v6e/v7x): bf16 inputs, f32 accumulate.  Exact f32 else.
    kind = _device_kind()
    if "v6" in kind or "v7" in kind:
        return jnp.bfloat16
    return None


class DummyTransformerPallas:
    """JAX/Pallas port of DummyTransformer (hidden_size, num_heads)."""

    def __init__(self, hidden_size=768, num_heads=12, dtype=jnp.float32,
                 matmul_dtype="auto", seed=0):
        assert hidden_size % num_heads == 0
        self.hidden_size = hidden_size
        self.num_heads = num_heads
        self.head_dim = hidden_size // num_heads
        if matmul_dtype == "auto":
            matmul_dtype = _default_matmul_dtype()
        self.matmul_dtype = matmul_dtype
        self._min_row_blocks = _default_min_row_blocks()

        key = jax.random.PRNGKey(seed)
        ks = jax.random.split(key, 8)
        scale = 1.0 / jnp.sqrt(hidden_size)
        # Weights stored [H_in, H_out] (PyTorch weight.T); biases [1, H_out].
        self.wq = (jax.random.normal(ks[0], (hidden_size, hidden_size)) * scale).astype(dtype)
        self.bq = (jax.random.normal(ks[1], (1, hidden_size)) * scale).astype(dtype)
        self.wk = (jax.random.normal(ks[2], (hidden_size, hidden_size)) * scale).astype(dtype)
        self.bk = (jax.random.normal(ks[3], (1, hidden_size)) * scale).astype(dtype)
        self.wv = (jax.random.normal(ks[4], (hidden_size, hidden_size)) * scale).astype(dtype)
        self.bv = (jax.random.normal(ks[5], (1, hidden_size)) * scale).astype(dtype)
        # q_proj / o_proj exist only for parameter parity with the reference
        # module: q_proj's output is dead in forward, o_proj is never called.
        self.wo = (jax.random.normal(ks[6], (hidden_size, hidden_size)) * scale).astype(dtype)
        self.bo = (jax.random.normal(ks[7], (1, hidden_size)) * scale).astype(dtype)

        # Pre-cast the hot-path weights ONCE (hoisted out of __call__).
        if matmul_dtype is not None:
            self.wk_mm = self.wk.astype(matmul_dtype)
            self.wv_mm = self.wv.astype(matmul_dtype)
        else:
            self.wk_mm, self.wv_mm = self.wk, self.wv

    def __call__(self, hidden_states, past_key_values: Optional[KVCache] = None):
        B, S, H = hidden_states.shape
        x2d = hidden_states.reshape(B * S, H)
        if self.matmul_dtype is not None:
            x2d = x2d.astype(self.matmul_dtype)

        k2d, v2d = kv_projection(
            x2d, self.wk_mm, self.wv_mm, self.bk, self.bv,
            out_dtype=hidden_states.dtype,
            min_row_blocks=self._min_row_blocks,
        )
        k = k2d.reshape(B, S, H)
        v = v2d.reshape(B, S, H)

        if past_key_values is not None:
            # TODO(synk): real incremental decode should preallocate a max-length cache updated in place (input_output_aliases / dynamic_update_slice) instead of this O(total_len) concat; kept as concatenate to preserve the reference's exact output shapes.
            k = jnp.concatenate([past_key_values.key_states, k], axis=1)
            v = jnp.concatenate([past_key_values.value_states, v], axis=1)

        sequence_ids = jnp.arange(k.shape[1], dtype=jnp.int32)
        return hidden_states, KVCache(k, v, sequence_ids)


# ----------------------------------------------------------------------------
# Self-test
# ----------------------------------------------------------------------------
if __name__ == "__main__":
    # H = 128 keeps the toy small while making the K/V stores lane-dense
    # (multiple of 128 lanes, like the real module's H = 768).
    batch, seq, hidden, heads = 2, 8, 128, 4
    key = jax.random.PRNGKey(0)
    x = jax.random.normal(key, (batch, seq, hidden), dtype=jnp.float32)

    model = DummyTransformerPallas(hidden_size=hidden, num_heads=heads, seed=0)

    # First call (no cache), second call uses the cache (concat along seq).
    out_hidden, cache = model(x)
    out_hidden2, cache2 = model(x, past_key_values=cache)
    jax.block_until_ready(out_hidden)
    jax.block_until_ready(cache.key_states)
    jax.block_until_ready(cache2.key_states)

    # Tolerance depends on whether the bf16-matmul path is active on this chip.
    tol = 1e-5 if model.matmul_dtype is None else 5e-2

    x2d = x.reshape(batch * seq, hidden)
    k_ref = (x2d @ model.wk + model.bk).reshape(batch, seq, hidden)
    v_ref = (x2d @ model.wv + model.bv).reshape(batch, seq, hidden)
    assert jnp.allclose(cache.key_states, k_ref, atol=tol, rtol=tol)
    assert jnp.allclose(cache.value_states, v_ref, atol=tol, rtol=tol)
    assert out_hidden.shape == (batch, seq, hidden)
    assert jnp.array_equal(out_hidden, x)
    assert cache2.key_states.shape == (batch, 2 * seq, hidden)
    assert cache2.value_states.shape == (batch, 2 * seq, hidden)
    assert cache2.sequence_ids.shape == (2 * seq,)
    assert jnp.allclose(cache2.key_states[:, seq:], k_ref, atol=tol, rtol=tol)
    assert jnp.array_equal(cache2.key_states[:, :seq], cache.key_states)

    # Ragged-grid check: force a block_m that does not divide M and verify the
    # masked edge block never writes garbage rows (no pad / slice needed).
    xr = jax.random.normal(jax.random.PRNGKey(1), (20, hidden), dtype=jnp.float32)
    xr_in = xr.astype(model.matmul_dtype) if model.matmul_dtype is not None else xr
    k20, v20 = kv_projection(xr_in, model.wk_mm, model.wv_mm, model.bk, model.bv,
                             out_dtype=jnp.float32, block_m=8)
    jax.block_until_ready(k20)
    assert k20.shape == (20, hidden) and v20.shape == (20, hidden)
    assert jnp.allclose(k20, xr @ model.wk + model.bk, atol=tol, rtol=tol)
    assert jnp.allclose(v20, xr @ model.wv + model.bv, atol=tol, rtol=tol)

    print("KERNEL_OK")
</pallas_src>

<mosaic_0001>
module attributes {stable_mosaic.version = 11 : i64} {
  func.func @_kv_proj_kernel(%arg0: i32, %arg1: memref<16x128xf32, #tpu.memory_space<vmem>>, %arg2: memref<128x128xf32, #tpu.memory_space<vmem>>, %arg3: memref<128x128xf32, #tpu.memory_space<vmem>>, %arg4: memref<1x128xf32, #tpu.memory_space<vmem>>, %arg5: memref<1x128xf32, #tpu.memory_space<vmem>>, %arg6: memref<16x128xf32, #tpu.memory_space<vmem>>, %arg7: memref<16x128xf32, #tpu.memory_space<vmem>>) attributes {dimension_semantics = [#tpu.dimension_semantics<parallel>], iteration_bounds = array<i64: 1>, scalar_prefetch = 0 : i64, scratch_operands = 0 : i64, tpu.core_type = #tpu.core_type<tc>, window_params = [{transform_indices = @transform_0, window_bounds = array<i64: 16, 128>}, {pipeline_mode = #tpu.pipeline_mode<synchronous>, transform_indices = @transform_1, window_bounds = array<i64: 128, 128>}, {pipeline_mode = #tpu.pipeline_mode<synchronous>, transform_indices = @transform_2, window_bounds = array<i64: 128, 128>}, {pipeline_mode = #tpu.pipeline_mode<synchronous>, transform_indices = @transform_3, window_bounds = array<i64: 1, 128>}, {pipeline_mode = #tpu.pipeline_mode<synchronous>, transform_indices = @transform_4, window_bounds = array<i64: 1, 128>}, {transform_indices = @transform_5, window_bounds = array<i64: 16, 128>}, {transform_indices = @transform_6, window_bounds = array<i64: 16, 128>}]} {
    %c0 = arith.constant 0 : index
    %c0_0 = arith.constant 0 : index
    %0 = vector.load %arg1[%c0, %c0_0] : memref<16x128xf32, #tpu.memory_space<vmem>>, vector<16x128xf32>
    %c0_1 = arith.constant 0 : index
    %c0_2 = arith.constant 0 : index
    %1 = vector.load %arg2[%c0_1, %c0_2] : memref<128x128xf32, #tpu.memory_space<vmem>>, vector<128x128xf32>
    %cst = arith.constant dense<0.000000e+00> : vector<16x128xf32>
    %2 = tpu.matmul %0, %1, %cst {dimension_numbers = #tpu.dot_dimension_numbers<[1], [0], [0], [1], [0, 0, 1, 1], [], []>} : vector<16x128xf32>, vector<128x128xf32>, vector<16x128xf32> -> vector<16x128xf32>
    %c0_3 = arith.constant 0 : index
    %c0_4 = arith.constant 0 : index
    %3 = vector.load %arg3[%c0_3, %c0_4] : memref<128x128xf32, #tpu.memory_space<vmem>>, vector<128x128xf32>
    %cst_5 = arith.constant dense<0.000000e+00> : vector<16x128xf32>
    %4 = tpu.matmul %0, %3, %cst_5 {dimension_numbers = #tpu.dot_dimension_numbers<[1], [0], [0], [1], [0, 0, 1, 1], [], []>} : vector<16x128xf32>, vector<128x128xf32>, vector<16x128xf32> -> vector<16x128xf32>
    %c0_6 = arith.constant 0 : index
    %c0_7 = arith.constant 0 : index
    %5 = vector.load %arg4[%c0_6, %c0_7] : memref<1x128xf32, #tpu.memory_space<vmem>>, vector<1x128xf32>
    %6 = vector.broadcast %5 : vector<1x128xf32> to vector<16x128xf32>
    %7 = arith.addf %2, %6 : vector<16x128xf32>
    %c0_8 = arith.constant 0 : index
    %c0_9 = arith.constant 0 : index
    %8 = vector.load %arg6[%c0_8, %c0_9] : memref<16x128xf32, #tpu.memory_space<vmem>>, vector<16x128xf32>
    tpu.vector_store %arg6[%c0_8, %c0_9], %7 {strides = array<i32>} : memref<16x128xf32, #tpu.memory_space<vmem>>, vector<16x128xf32>,
    %c0_10 = arith.constant 0 : index
    %c0_11 = arith.constant 0 : index
    %9 = vector.load %arg5[%c0_10, %c0_11] : memref<1x128xf32, #tpu.memory_space<vmem>>, vector<1x128xf32>
    %10 = vector.broadcast %9 : vector<1x128xf32> to vector<16x128xf32>
    %11 = arith.addf %4, %10 : vector<16x128xf32>
    %c0_12 = arith.constant 0 : index
    %c0_13 = arith.constant 0 : index
    %12 = vector.load %arg7[%c0_12, %c0_13] : memref<16x128xf32, #tpu.memory_space<vmem>>, vector<16x128xf32>
    tpu.vector_store %arg7[%c0_12, %c0_13], %11 {strides = array<i32>} : memref<16x128xf32, #tpu.memory_space<vmem>>, vector<16x128xf32>,
    return
  }
  func.func @transform_0(%arg0: i32) -> (i32, i32) {
    %c0_i32 = arith.constant 0 : i32
    %c0_i32_0 = arith.constant 0 : i32
    return %arg0, %c0_i32 : i32, i32
  }
  func.func @transform_1(%arg0: i32) -> (i32, i32) {
    %c0_i32 = arith.constant 0 : i32
    %c0_i32_0 = arith.constant 0 : i32
    %c0_i32_1 = arith.constant 0 : i32
    return %c0_i32, %c0_i32_0 : i32, i32
  }
  func.func @transform_2(%arg0: i32) -> (i32, i32) {
    %c0_i32 = arith.constant 0 : i32
    %c0_i32_0 = arith.constant 0 : i32
    %c0_i32_1 = arith.constant 0 : i32
    return %c0_i32, %c0_i32_0 : i32, i32
  }
  func.func @transform_3(%arg0: i32) -> (i32, i32) {
    %c0_i32 = arith.constant 0 : i32
    %c0_i32_0 = arith.constant 0 : i32
    %c0_i32_1 = arith.constant 0 : i32
    return %c0_i32, %c0_i32_0 : i32, i32
  }
  func.func @transform_4(%arg0: i32) -> (i32, i32) {
    %c0_i32 = arith.constant 0 : i32
    %c0_i32_0 = arith.constant 0 : i32
    %c0_i32_1 = arith.constant 0 : i32
    return %c0_i32, %c0_i32_0 : i32, i32
  }
  func.func @transform_5(%arg0: i32) -> (i32, i32) {
    %c0_i32 = arith.constant 0 : i32
    %c0_i32_0 = arith.constant 0 : i32
    return %arg0, %c0_i32 : i32, i32
  }
  func.func @transform_6(%arg0: i32) -> (i32, i32) {
    %c0_i32 = arith.constant 0 : i32
    %c0_i32_0 = arith.constant 0 : i32
    return %arg0, %c0_i32 : i32, i32
  }
}

module attributes {stable_mosaic.version = 11 : i64} {
  func.func @_kv_proj_kernel(%arg0: i32, %arg1: memref<16x128xf32, #tpu.memory_space<vmem>>, %arg2: memref<128x128xf32, #tpu.memory_space<vmem>>, %arg3: memref<128x128xf32, #tpu.memory_space<vmem>>, %arg4: memref<1x128xf32, #tpu.memory_space<vmem>>, %arg5: memref<1x128xf32, #tpu.memory_space<vmem>>, %arg6: memref<16x128xf32, #tpu.memory_space<vmem>>, %arg7: memref<16x128xf32, #tpu.memory_space<vmem>>) attributes {dimension_semantics = [#tpu.dimension_semantics<parallel>], iteration_bounds = array<i64: 1>, scalar_prefetch = 0 : i64, scratch_operands = 0 : i64, tpu.core_type = #tpu.core_type<tc>, window_params = [{transform_indices = @transform_0, window_bounds = array<i64: 16, 128>}, {pipeline_mode = #tpu.pipeline_mode<synchronous>, transform_indices = @transform_1, window_bounds = array<i64: 128, 128>}, {pipeline_mode = #tpu.pipeline_mode<synchronous>, transform_indices = @transform_2, window_bounds = array<i64: 128, 128>}, {pipeline_mode = #tpu.pipeline_mode<synchronous>, transform_indices = @transform_3, window_bounds = array<i64: 1, 128>}, {pipeline_mode = #tpu.pipeline_mode<synchronous>, transform_indices = @transform_4, window_bounds = array<i64: 1, 128>}, {transform_indices = @transform_5, window_bounds = array<i64: 16, 128>}, {transform_indices = @transform_6, window_bounds = array<i64: 16, 128>}]} {
    %c0 = arith.constant 0 : index
    %c0_0 = arith.constant 0 : index
    %0 = vector.load %arg1[%c0, %c0_0] : memref<16x128xf32, #tpu.memory_space<vmem>>, vector<16x128xf32>
    %c0_1 = arith.constant 0 : index
    %c0_2 = arith.constant 0 : index
    %1 = vector.load %arg2[%c0_1, %c0_2] : memref<128x128xf32, #tpu.memory_space<vmem>>, vector<128x128xf32>
    %cst = arith.constant dense<0.000000e+00> : vector<16x128xf32>
    %2 = tpu.matmul %0, %1, %cst {dimension_numbers = #tpu.dot_dimension_numbers<[1], [0], [0], [1], [0, 0, 1, 1], [], []>} : vector<16x128xf32>, vector<128x128xf32>, vector<16x128xf32> -> vector<16x128xf32>
    %c0_3 = arith.constant 0 : index
    %c0_4 = arith.constant 0 : index
    %3 = vector.load %arg3[%c0_3, %c0_4] : memref<128x128xf32, #tpu.memory_space<vmem>>, vector<128x128xf32>
    %cst_5 = arith.constant dense<0.000000e+00> : vector<16x128xf32>
    %4 = tpu.matmul %0, %3, %cst_5 {dimension_numbers = #tpu.dot_dimension_numbers<[1], [0], [0], [1], [0, 0, 1, 1], [], []>} : vector<16x128xf32>, vector<128x128xf32>, vector<16x128xf32> -> vector<16x128xf32>
    %c0_6 = arith.constant 0 : index
    %c0_7 = arith.constant 0 : index
    %5 = vector.load %arg4[%c0_6, %c0_7] : memref<1x128xf32, #tpu.memory_space<vmem>>, vector<1x128xf32>
    %6 = vector.broadcast %5 : vector<1x128xf32> to vector<16x128xf32>
    %7 = arith.addf %2, %6 : vector<16x128xf32>
    %c0_8 = arith.constant 0 : index
    %c0_9 = arith.constant 0 : index
    %8 = vector.load %arg6[%c0_8, %c0_9] : memref<16x128xf32, #tpu.memory_space<vmem>>, vector<16x128xf32>
    tpu.vector_store %arg6[%c0_8, %c0_9], %7 {strides = array<i32>} : memref<16x128xf32, #tpu.memory_space<vmem>>, vector<16x128xf32>,
    %c0_10 = arith.constant 0 : index
    %c0_11 = arith.constant 0 : index
    %9 = vector.load %arg5[%c0_10, %c0_11] : memref<1x128xf32, #tpu.memory_space<vmem>>, vector<1x128xf32>
    %10 = vector.broadcast %9 : vector<1x128xf32> to vector<16x128xf32>
    %11 = arith.addf %4, %10 : vector<16x128xf32>
    %c0_12 = arith.constant 0 : index
    %c0_13 = arith.constant 0 : index
    %12 = vector.load %arg7[%c0_12, %c0_13] : memref<16x128xf32, #tpu.memory_space<vmem>>, vector<16x128xf32>
    tpu.vector_store %arg7[%c0_12, %c0_13], %11 {strides = array<i32>} : memref<16x128xf32, #tpu.memory_space<vmem>>, vector<16x128xf32>,
    return
  }
  func.func @transform_0(%arg0: i32) -> (i32, i32) {
    %c0_i32 = arith.constant 0 : i32
    %c0_i32_0 = arith.constant 0 : i32
    return %arg0, %c0_i32 : i32, i32
  }
  func.func @transform_1(%arg0: i32) -> (i32, i32) {
    %c0_i32 = arith.constant 0 : i32
    %c0_i32_0 = arith.constant 0 : i32
    %c0_i32_1 = arith.constant 0 : i32
    return %c0_i32, %c0_i32_0 : i32, i32
  }
  func.func @transform_2(%arg0: i32) -> (i32, i32) {
    %c0_i32 = arith.constant 0 : i32
    %c0_i32_0 = arith.constant 0 : i32
    %c0_i32_1 = arith.constant 0 : i32
    return %c0_i32, %c0_i32_0 : i32, i32
  }
  func.func @transform_3(%arg0: i32) -> (i32, i32) {
    %c0_i32 = arith.constant 0 : i32
    %c0_i32_0 = arith.constant 0 : i32
    %c0_i32_1 = arith.constant 0 : i32
    return %c0_i32, %c0_i32_0 : i32, i32
  }
  func.func @transform_4(%arg0: i32) -> (i32, i32) {
    %c0_i32 = arith.constant 0 : i32
    %c0_i32_0 = arith.constant 0 : i32
    %c0_i32_1 = arith.constant 0 : i32
    return %c0_i32, %c0_i32_0 : i32, i32
  }
  func.func @transform_5(%arg0: i32) -> (i32, i32) {
    %c0_i32 = arith.constant 0 : i32
    %c0_i32_0 = arith.constant 0 : i32
    return %arg0, %c0_i32 : i32, i32
  }
  func.func @transform_6(%arg0: i32) -> (i32, i32) {
    %c0_i32 = arith.constant 0 : i32
    %c0_i32_0 = arith.constant 0 : i32
    return %arg0, %c0_i32 : i32, i32
  }
}

</mosaic_0001>

<llo_original>
// kernel: tpu_custom_call.1
$region0: #{tpu_custom_call.1}
  #allocation0 [shape = 'u32[]', space=smem, size = 0x4, offset = 0x4, fixed_abs, tag = 'smem constant byte address 0x4 - core index']
  #allocation1 [shape = 'u32[72,128]{1,0:T(1,128)}', space=vmem, size = 0x9000, scoped, tag = 'internal scratch']
  %s0 = inlined_call_operand.hbm [shape: f32[16,128], index: 0, kind: input, shape index: {}]
  %s1 = inlined_call_operand.hbm [shape: f32[128,128], index: 1, kind: input, shape index: {}]
  %s2 = inlined_call_operand.hbm [shape: f32[128,128], index: 2, kind: input, shape index: {}]
  %s3 = inlined_call_operand.vmem [shape: f32[1,128], index: 3, kind: input, shape index: {}]
  %s4 = inlined_call_operand.vmem [shape: f32[1,128], index: 4, kind: input, shape index: {}]
  %s5 = inlined_call_operand.hbm [shape: f32[16,128], index: 5, kind: output, shape index: {0}]
  %s6 = inlined_call_operand.hbm [shape: f32[16,128], index: 6, kind: output, shape index: {1}]
  %7 = xla_tuple %s5, %s6
  %s8 = sld [smem:[#allocation0]]
  $region50: #{tpu_custom_call.1} parent=0
    _
  %s10 = ssub.s32 1, %s8
  %s11 = scalar_select 0, %s10, %s8
  $region1: #{tpu_custom_call.1} parent=0
    #allocation2 [shape = 'u8[8192]{0}', space=vmem, size = 0x2000, scoped, tag = 'input window, operand 0, single buffered']
    #allocation3 [shape = 's32[1]{0}', space=sflag, size = 0x4, scoped, tag = 'scoped memory for tpu_custom_call.1']
    #allocation4 [shape = 's32[1]{0}', space=sflag, size = 0x4, scoped, tag = 'scoped memory for tpu_custom_call.1']
    #allocation5 [shape = 'u8[65536]{0}', space=vmem, size = 0x10000, scoped, tag = 'input window, operand 1, single buffered']
    #allocation6 [shape = 's32[1]{0}', space=sflag, size = 0x4, scoped, tag = 'scoped memory for tpu_custom_call.1']
    #allocation7 [shape = 'u8[65536]{0}', space=vmem, size = 0x10000, scoped, tag = 'input window, operand 2, single buffered']
    #allocation8 [shape = 'u8[8192]{0}', space=vmem, size = 0x2000, scoped, tag = 'output window, operand 0, single buffered']
    #allocation9 [shape = 'u8[8192]{0}', space=vmem, size = 0x2000, scoped, tag = 'output window, operand 1, single buffered']
    #allocation10 [shape = 's32[1]{0}', space=sflag, size = 0x4, scoped, tag = 'scoped memory for tpu_custom_call.1']
    %12 = vsyncpa [#allocation3], 0
    %13 = vsyncpa [#allocation6], 0
    %14 = vsyncpa [#allocation4], 0
    %15 = vsyncpa [#allocation10], 0
    // Predicated region
    $region2: #{tpu_custom_call.1} parent=1 // pred_check
      _
    $region3: #{tpu_custom_call.1} parent=1 // pred_check_branch
      %17 = sbr.rel (0) target = $region5
    $region4: #{tpu_custom_call.1} parent=1 // pred_region
      %19 = vsyncadd [#allocation3], 0
      %s20 = sshll.u32 %s0, 4
      %s21 = int_to_ptr.hbm [resolvable:$true] %s20
      %s22 = sshll.u32 [#allocation2], 4
      %s23 = int_to_ptr.vmem [resolvable:$true] %s22
      %28 = dma.hbm_to_vmem [thread:$0]  %s21, 256, %s23, [#allocation3], 128, 128, 8
    $region5: #{tpu_custom_call.1} parent=1 // pred_fallthru
      _
    // Predicated region
    $region6: #{tpu_custom_call.1} parent=1 // pred_check
      _
    $region7: #{tpu_custom_call.1} parent=1 // pred_check_branch
      %30 = sbr.rel (0) target = $region9
    $region8: #{tpu_custom_call.1} parent=1 // pred_region
      %32 = vsyncadd [#allocation6], 0
      %s33 = sshll.u32 %s1, 4
      %s34 = int_to_ptr.hbm [resolvable:$true] %s33
      %s35 = sshll.u32 [#allocation5], 4
      %s36 = int_to_ptr.vmem [resolvable:$true] %s35
      %41 = dma.hbm_to_vmem [thread:$0]  %s34, 2048, %s36, [#allocation6], 128, 128, 8
    $region9: #{tpu_custom_call.1} parent=1 // pred_fallthru
      _
    // Predicated region
    $region10: #{tpu_custom_call.1} parent=1 // pred_check
      _
    $region11: #{tpu_custom_call.1} parent=1 // pred_check_branch
      %43 = sbr.rel (0) target = $region13
    $region12: #{tpu_custom_call.1} parent=1 // pred_region
      %45 = vsyncadd [#allocation6], 0
      %s46 = sshll.u32 %s2, 4
      %s47 = int_to_ptr.hbm [resolvable:$true] %s46
      %s48 = sshll.u32 [#allocation7], 4
      %s49 = int_to_ptr.vmem [resolvable:$true] %s48
      %54 = dma.hbm_to_vmem [thread:$0]  %s47, 2048, %s49, [#allocation6], 128, 128, 8
    $region13: #{tpu_custom_call.1} parent=1 // pred_fallthru
      _
    // Predicated region
    $region14: #{tpu_custom_call.1} parent=1 // pred_check
      _
    $region15: #{tpu_custom_call.1} parent=1 // pred_check_branch
      %56 = sbr.rel (0) target = $region17
    $region16: #{tpu_custom_call.1} parent=1 // pred_region
      _
    $region17: #{tpu_custom_call.1} parent=1 // pred_fallthru
      _
    // Predicated region
    $region18: #{tpu_custom_call.1} parent=1 // pred_check
      _
    $region19: #{tpu_custom_call.1} parent=1 // pred_check_branch
      %58 = sbr.rel (0) target = $region21
    $region20: #{tpu_custom_call.1} parent=1 // pred_region
      _
    $region21: #{tpu_custom_call.1} parent=1 // pred_fallthru
      _
    // Predicated region
    $region22: #{tpu_custom_call.1} parent=1 // pred_check
      _
    $region23: #{tpu_custom_call.1} parent=1 // pred_check_branch
      %60 = sbr.rel (0) target = $region25
    $region24: #{tpu_custom_call.1} parent=1 // pred_region
      %62 = dma.done [#allocation3], 256
    $region25: #{tpu_custom_call.1} parent=1 // pred_fallthru
      _
    // Predicated region
    $region26: #{tpu_custom_call.1} parent=1 // pred_check
      _
    $region27: #{tpu_custom_call.1} parent=1 // pred_check_branch
      %64 = sbr.rel (0) target = $region29
    $region28: #{tpu_custom_call.1} parent=1 // pred_region
      %66 = dma.done [#allocation6], 2048
    $region29: #{tpu_custom_call.1} parent=1 // pred_fallthru
      _
    // Predicated region
    $region30: #{tpu_custom_call.1} parent=1 // pred_check
      _
    $region31: #{tpu_custom_call.1} parent=1 // pred_check_branch
      %68 = sbr.rel (0) target = $region33
    $region32: #{tpu_custom_call.1} parent=1 // pred_region
      %70 = dma.done [#allocation6], 2048
    $region33: #{tpu_custom_call.1} parent=1 // pred_fallthru
      _
    %v71 = vld [vmem:[#allocation2] sm:$0xff]
    %v72 = vld [vmem:[#allocation2 + $0x8] sm:$0xff]
    %v73 = vld [vmem:[#allocation5] sm:$0xff]
    %v74 = vld [vmem:[#allocation5 + $0x8] sm:$0xff]
    %v75 = vld [vmem:[#allocation5 + $0x10] sm:$0xff]
    %v76 = vld [vmem:[#allocation5 + $0x18] sm:$0xff]
    %v77 = vld [vmem:[#allocation5 + $0x20] sm:$0xff]
    %v78 = vld [vmem:[#allocation5 + $0x28] sm:$0xff]
    %v79 = vld [vmem:[#allocation5 + $0x30] sm:$0xff]
    %v80 = vld [vmem:[#allocation5 + $0x38] sm:$0xff]
    %v81 = vld [vmem:[#allocation5 + $0x40] sm:$0xff]
    %v82 = vld [vmem:[#allocation5 + $0x48] sm:$0xff]
    %v83 = vld [vmem:[#allocation5 + $0x50] sm:$0xff]
    %v84 = vld [vmem:[#allocation5 + $0x58] sm:$0xff]
    %v85 = vld [vmem:[#allocation5 + $0x60] sm:$0xff]
    %v86 = vld [vmem:[#allocation5 + $0x68] sm:$0xff]
    %v87 = vld [vmem:[#allocation5 + $0x70] sm:$0xff]
    %v88 = vld [vmem:[#allocation5 + $0x78] sm:$0xff]
    %v89 = vld [vmem:[#allocation7] sm:$0xff]
    %v90 = vld [vmem:[#allocation7 + $0x8] sm:$0xff]
    %v91 = vld [vmem:[#allocation7 + $0x10] sm:$0xff]
    %v92 = vld [vmem:[#allocation7 + $0x18] sm:$0xff]
    %v93 = vld [vmem:[#allocation7 + $0x20] sm:$0xff]
    %v94 = vld [vmem:[#allocation7 + $0x28] sm:$0xff]
    %v95 = vld [vmem:[#allocation7 + $0x30] sm:$0xff]
    %v96 = vld [vmem:[#allocation7 + $0x38] sm:$0xff]
    %v97 = vld [vmem:[#allocation7 + $0x40] sm:$0xff]
    %v98 = vld [vmem:[#allocation7 + $0x48] sm:$0xff]
    %v99 = vld [vmem:[#allocation7 + $0x50] sm:$0xff]
    %v100 = vld [vmem:[#allocation7 + $0x58] sm:$0xff]
    %v101 = vld [vmem:[#allocation7 + $0x60] sm:$0xff]
    %v102 = vld [vmem:[#allocation7 + $0x68] sm:$0xff]
    %v103 = vld [vmem:[#allocation7 + $0x70] sm:$0xff]
    %v104 = vld [vmem:[#allocation7 + $0x78] sm:$0xff]
    %v105 = vld [vmem:[%s3] sm:$0x1]
    %v107 = vperm.slane %v105, 0
    %109 = vmatpush.msra.mxu0 %v88
    %110 = vmatpush.msra.mxu0 %v87
    %111 = vmatpush.msra.mxu0 %v86
    %112 = vmatpush.msra.mxu0 %v85
    %113 = vmatpush.msra.mxu0 %v84
    %114 = vmatpush.msra.mxu0 %v83
    %115 = vmatpush.msra.mxu0 %v82
    %116 = vmatpush.msra.mxu0 %v81
    %117 = vmatpush.msra.mxu0 %v80
    %118 = vmatpush.msra.mxu0 %v79
    %119 = vmatpush.msra.mxu0 %v78
    %120 = vmatpush.msra.mxu0 %v77
    %121 = vmatpush.msra.mxu0 %v76
    %122 = vmatpush.msra.mxu0 %v75
    %123 = vmatpush.msra.mxu0 %v74
    %124 = vmatpush.msra.mxu0 %v73
    %125 = vmatmul.f32.gmra.mxu0 %v71
    %v126 = vpop.f32.mrf.mxu0
    %v127 = vadd.f32 %v107, %v126
    %128 = vmatmul.f32.gmra.mxu0 %v72
    %v129 = vpop.f32.mrf.mxu0
    %v130 = vadd.f32 %v107, %v129
    %131 = vdwg.mxu0
    %132 = vst [vmem:[#allocation8] sm:$0xff] %v127
    %133 = vst [vmem:[#allocation8 + $0x8] sm:$0xff] %v130
    %v134 = vld [vmem:[%s4] sm:$0x1]
    %v136 = vperm.slane %v134, 0
    %138 = vmatpush.msra.mxu0 %v104
    %139 = vmatpush.msra.mxu0 %v103
    %140 = vmatpush.msra.mxu0 %v102
    %141 = vmatpush.msra.mxu0 %v101
    %142 = vmatpush.msra.mxu0 %v100
    %143 = vmatpush.msra.mxu0 %v99
    %144 = vmatpush.msra.mxu0 %v98
    %145 = vmatpush.msra.mxu0 %v97
    %146 = vmatpush.msra.mxu0 %v96
    %147 = vmatpush.msra.mxu0 %v95
    %148 = vmatpush.msra.mxu0 %v94
    %149 = vmatpush.msra.mxu0 %v93
    %150 = vmatpush.msra.mxu0 %v92
    %151 = vmatpush.msra.mxu0 %v91
    %152 = vmatpush.msra.mxu0 %v90
    %153 = vmatpush.msra.mxu0 %v89
    %154 = vmatmul.f32.gmra.mxu0 %v71
    %v155 = vpop.f32.mrf.mxu0
    %v156 = vadd.f32 %v136, %v155
    %157 = vmatmul.f32.gmra.mxu0 %v72
    %v158 = vpop.f32.mrf.mxu0
    %v159 = vadd.f32 %v136, %v158
    %160 = vdwg.mxu0
    %161 = vst [vmem:[#allocation9] sm:$0xff] %v156
    %162 = vst [vmem:[#allocation9 + $0x8] sm:$0xff] %v159
    // Predicated region
    $region34: #{tpu_custom_call.1} parent=1 // pred_check
      _
    $region35: #{tpu_custom_call.1} parent=1 // pred_check_branch
      %164 = sbr.rel (0) target = $region37
    $region36: #{tpu_custom_call.1} parent=1 // pred_region
      %166 = vsyncadd [#allocation4], 0
      %s167 = sshll.u32 [#allocation8], 4
      %s168 = int_to_ptr.vmem [resolvable:$true] %s167
      %s169 = sshll.u32 %s5, 4
      %s170 = int_to_ptr.hbm [resolvable:$true] %s169
      %175 = dma.vmem_to_hbm [thread:$0]  %s168, 256, %s170, [#allocation4], 128, 128, 8
    $region37: #{tpu_custom_call.1} parent=1 // pred_fallthru
      _
    // Predicated region
    $region38: #{tpu_custom_call.1} parent=1 // pred_check
      _
    $region39: #{tpu_custom_call.1} parent=1 // pred_check_branch
      %177 = sbr.rel (0) target = $region41
    $region40: #{tpu_custom_call.1} parent=1 // pred_region
      %179 = vsyncadd [#allocation10], 0
      %s180 = sshll.u32 [#allocation9], 4
      %s181 = int_to_ptr.vmem [resolvable:$true] %s180
      %s182 = sshll.u32 %s6, 4
      %s183 = int_to_ptr.hbm [resolvable:$true] %s182
      %188 = dma.vmem_to_hbm [thread:$0]  %s181, 256, %s183, [#allocation10], 128, 128, 8
    $region41: #{tpu_custom_call.1} parent=1 // pred_fallthru
      _
    // Predicated region
    $region42: #{tpu_custom_call.1} parent=1 // pred_check
      _
    $region43: #{tpu_custom_call.1} parent=1 // pred_check_branch
      %190 = sbr.rel (0) target = $region45
    $region44: #{tpu_custom_call.1} parent=1 // pred_region
      %192 = dma.done [#allocation4], 256
    $region45: #{tpu_custom_call.1} parent=1 // pred_fallthru
      _
    // Predicated region
    $region46: #{tpu_custom_call.1} parent=1 // pred_check
      _
    $region47: #{tpu_custom_call.1} parent=1 // pred_check_branch
      %194 = sbr.rel (0) target = $region49
    $region48: #{tpu_custom_call.1} parent=1 // pred_region
      %196 = dma.done [#allocation10], 256
    $region49: #{tpu_custom_call.1} parent=1 // pred_fallthru
      _
    %197 = vsyncpa [#allocation3], 1
    %198 = vsyncpa [#allocation6], 1
    %199 = vsyncpa [#allocation4], 1
    %200 = vsyncpa [#allocation10], 1

// kernel: tpu_custom_call.1
$region0: #{tpu_custom_call.1}
  #allocation0 [shape = 'u32[]', space=smem, size = 0x4, offset = 0x4, fixed_abs, tag = 'smem constant byte address 0x4 - core index']
  #allocation1 [shape = 'u32[72,128]{1,0:T(1,128)}', space=vmem, size = 0x9000, scoped, tag = 'internal scratch']
  %s0 = inlined_call_operand.hbm [shape: f32[16,128], index: 0, kind: input, shape index: {}]
  %s1 = inlined_call_operand.hbm [shape: f32[128,128], index: 1, kind: input, shape index: {}]
  %s2 = inlined_call_operand.hbm [shape: f32[128,128], index: 2, kind: input, shape index: {}]
  %s3 = inlined_call_operand.vmem [shape: f32[1,128], index: 3, kind: input, shape index: {}]
  %s4 = inlined_call_operand.vmem [shape: f32[1,128], index: 4, kind: input, shape index: {}]
  %s5 = inlined_call_operand.hbm [shape: f32[16,128], index: 5, kind: output, shape index: {0}]
  %s6 = inlined_call_operand.hbm [shape: f32[16,128], index: 6, kind: output, shape index: {1}]
  %7 = xla_tuple %s5, %s6
  %s8 = sld [smem:[#allocation0]]
  $region50: #{tpu_custom_call.1} parent=0
    _
  %s10 = ssub.s32 1, %s8
  %s11 = scalar_select 0, %s10, %s8
  $region1: #{tpu_custom_call.1} parent=0
    #allocation2 [shape = 'u8[8192]{0}', space=vmem, size = 0x2000, scoped, tag = 'input window, operand 0, single buffered']
    #allocation3 [shape = 's32[1]{0}', space=sflag, size = 0x4, scoped, tag = 'scoped memory for tpu_custom_call.1']
    #allocation4 [shape = 's32[1]{0}', space=sflag, size = 0x4, scoped, tag = 'scoped memory for tpu_custom_call.1']
    #allocation5 [shape = 'u8[65536]{0}', space=vmem, size = 0x10000, scoped, tag = 'input window, operand 1, single buffered']
    #allocation6 [shape = 's32[1]{0}', space=sflag, size = 0x4, scoped, tag = 'scoped memory for tpu_custom_call.1']
    #allocation7 [shape = 'u8[65536]{0}', space=vmem, size = 0x10000, scoped, tag = 'input window, operand 2, single buffered']
    #allocation8 [shape = 'u8[8192]{0}', space=vmem, size = 0x2000, scoped, tag = 'output window, operand 0, single buffered']
    #allocation9 [shape = 'u8[8192]{0}', space=vmem, size = 0x2000, scoped, tag = 'output window, operand 1, single buffered']
    #allocation10 [shape = 's32[1]{0}', space=sflag, size = 0x4, scoped, tag = 'scoped memory for tpu_custom_call.1']
    %12 = vsyncpa [#allocation3], 0
    %13 = vsyncpa [#allocation6], 0
    %14 = vsyncpa [#allocation4], 0
    %15 = vsyncpa [#allocation10], 0
    // Predicated region
    $region2: #{tpu_custom_call.1} parent=1 // pred_check
      _
    $region3: #{tpu_custom_call.1} parent=1 // pred_check_branch
      %17 = sbr.rel (0) target = $region5
    $region4: #{tpu_custom_call.1} parent=1 // pred_region
      %19 = vsyncadd [#allocation3], 0
      %s20 = sshll.u32 %s0, 4
      %s21 = int_to_ptr.hbm [resolvable:$true] %s20
      %s22 = sshll.u32 [#allocation2], 4
      %s23 = int_to_ptr.vmem [resolvable:$true] %s22
      %28 = dma.hbm_to_vmem [thread:$0]  %s21, 256, %s23, [#allocation3], 128, 128, 8
    $region5: #{tpu_custom_call.1} parent=1 // pred_fallthru
      _
    // Predicated region
    $region6: #{tpu_custom_call.1} parent=1 // pred_check
      _
    $region7: #{tpu_custom_call.1} parent=1 // pred_check_branch
      %30 = sbr.rel (0) target = $region9
    $region8: #{tpu_custom_call.1} parent=1 // pred_region
      %32 = vsyncadd [#allocation6], 0
      %s33 = sshll.u32 %s1, 4
      %s34 = int_to_ptr.hbm [resolvable:$true] %s33
      %s35 = sshll.u32 [#allocation5], 4
      %s36 = int_to_ptr.vmem [resolvable:$true] %s35
      %41 = dma.hbm_to_vmem [thread:$0]  %s34, 2048, %s36, [#allocation6], 128, 128, 8
    $region9: #{tpu_custom_call.1} parent=1 // pred_fallthru
      _
    // Predicated region
    $region10: #{tpu_custom_call.1} parent=1 // pred_check
      _
    $region11: #{tpu_custom_call.1} parent=1 // pred_check_branch
      %43 = sbr.rel (0) target = $region13
    $region12: #{tpu_custom_call.1} parent=1 // pred_region
      %45 = vsyncadd [#allocation6], 0
      %s46 = sshll.u32 %s2, 4
      %s47 = int_to_ptr.hbm [resolvable:$true] %s46
      %s48 = sshll.u32 [#allocation7], 4
      %s49 = int_to_ptr.vmem [resolvable:$true] %s48
      %54 = dma.hbm_to_vmem [thread:$0]  %s47, 2048, %s49, [#allocation6], 128, 128, 8
    $region13: #{tpu_custom_call.1} parent=1 // pred_fallthru
      _
    // Predicated region
    $region14: #{tpu_custom_call.1} parent=1 // pred_check
      _
    $region15: #{tpu_custom_call.1} parent=1 // pred_check_branch
      %56 = sbr.rel (0) target = $region17
    $region16: #{tpu_custom_call.1} parent=1 // pred_region
      _
    $region17: #{tpu_custom_call.1} parent=1 // pred_fallthru
      _
    // Predicated region
    $region18: #{tpu_custom_call.1} parent=1 // pred_check
      _
    $region19: #{tpu_custom_call.1} parent=1 // pred_check_branch
      %58 = sbr.rel (0) target = $region21
    $region20: #{tpu_custom_call.1} parent=1 // pred_region
      _
    $region21: #{tpu_custom_call.1} parent=1 // pred_fallthru
      _
    // Predicated region
    $region22: #{tpu_custom_call.1} parent=1 // pred_check
      _
    $region23: #{tpu_custom_call.1} parent=1 // pred_check_branch
      %60 = sbr.rel (0) target = $region25
    $region24: #{tpu_custom_call.1} parent=1 // pred_region
      %62 = dma.done [#allocation3], 256
    $region25: #{tpu_custom_call.1} parent=1 // pred_fallthru
      _
    // Predicated region
    $region26: #{tpu_custom_call.1} parent=1 // pred_check
      _
    $region27: #{tpu_custom_call.1} parent=1 // pred_check_branch
      %64 = sbr.rel (0) target = $region29
    $region28: #{tpu_custom_call.1} parent=1 // pred_region
      %66 = dma.done [#allocation6], 2048
    $region29: #{tpu_custom_call.1} parent=1 // pred_fallthru
      _
    // Predicated region
    $region30: #{tpu_custom_call.1} parent=1 // pred_check
      _
    $region31: #{tpu_custom_call.1} parent=1 // pred_check_branch
      %68 = sbr.rel (0) target = $region33
    $region32: #{tpu_custom_call.1} parent=1 // pred_region
      %70 = dma.done [#allocation6], 2048
    $region33: #{tpu_custom_call.1} parent=1 // pred_fallthru
      _
    %v71 = vld [vmem:[#allocation2] sm:$0xff]
    %v72 = vld [vmem:[#allocation2 + $0x8] sm:$0xff]
    %v73 = vld [vmem:[#allocation5] sm:$0xff]
    %v74 = vld [vmem:[#allocation5 + $0x8] sm:$0xff]
    %v75 = vld [vmem:[#allocation5 + $0x10] sm:$0xff]
    %v76 = vld [vmem:[#allocation5 + $0x18] sm:$0xff]
    %v77 = vld [vmem:[#allocation5 + $0x20] sm:$0xff]
    %v78 = vld [vmem:[#allocation5 + $0x28] sm:$0xff]
    %v79 = vld [vmem:[#allocation5 + $0x30] sm:$0xff]
    %v80 = vld [vmem:[#allocation5 + $0x38] sm:$0xff]
    %v81 = vld [vmem:[#allocation5 + $0x40] sm:$0xff]
    %v82 = vld [vmem:[#allocation5 + $0x48] sm:$0xff]
    %v83 = vld [vmem:[#allocation5 + $0x50] sm:$0xff]
    %v84 = vld [vmem:[#allocation5 + $0x58] sm:$0xff]
    %v85 = vld [vmem:[#allocation5 + $0x60] sm:$0xff]
    %v86 = vld [vmem:[#allocation5 + $0x68] sm:$0xff]
    %v87 = vld [vmem:[#allocation5 + $0x70] sm:$0xff]
    %v88 = vld [vmem:[#allocation5 + $0x78] sm:$0xff]
    %v89 = vld [vmem:[#allocation7] sm:$0xff]
    %v90 = vld [vmem:[#allocation7 + $0x8] sm:$0xff]
    %v91 = vld [vmem:[#allocation7 + $0x10] sm:$0xff]
    %v92 = vld [vmem:[#allocation7 + $0x18] sm:$0xff]
    %v93 = vld [vmem:[#allocation7 + $0x20] sm:$0xff]
    %v94 = vld [vmem:[#allocation7 + $0x28] sm:$0xff]
    %v95 = vld [vmem:[#allocation7 + $0x30] sm:$0xff]
    %v96 = vld [vmem:[#allocation7 + $0x38] sm:$0xff]
    %v97 = vld [vmem:[#allocation7 + $0x40] sm:$0xff]
    %v98 = vld [vmem:[#allocation7 + $0x48] sm:$0xff]
    %v99 = vld [vmem:[#allocation7 + $0x50] sm:$0xff]
    %v100 = vld [vmem:[#allocation7 + $0x58] sm:$0xff]
    %v101 = vld [vmem:[#allocation7 + $0x60] sm:$0xff]
    %v102 = vld [vmem:[#allocation7 + $0x68] sm:$0xff]
    %v103 = vld [vmem:[#allocation7 + $0x70] sm:$0xff]
    %v104 = vld [vmem:[#allocation7 + $0x78] sm:$0xff]
    %v105 = vld [vmem:[%s3] sm:$0x1]
    %v107 = vperm.slane %v105, 0
    %109 = vmatpush.msra.mxu0 %v88
    %110 = vmatpush.msra.mxu0 %v87
    %111 = vmatpush.msra.mxu0 %v86
    %112 = vmatpush.msra.mxu0 %v85
    %113 = vmatpush.msra.mxu0 %v84
    %114 = vmatpush.msra.mxu0 %v83
    %115 = vmatpush.msra.mxu0 %v82
    %116 = vmatpush.msra.mxu0 %v81
    %117 = vmatpush.msra.mxu0 %v80
    %118 = vmatpush.msra.mxu0 %v79
    %119 = vmatpush.msra.mxu0 %v78
    %120 = vmatpush.msra.mxu0 %v77
    %121 = vmatpush.msra.mxu0 %v76
    %122 = vmatpush.msra.mxu0 %v75
    %123 = vmatpush.msra.mxu0 %v74
    %124 = vmatpush.msra.mxu0 %v73
    %125 = vmatmul.f32.gmra.mxu0 %v71
    %v126 = vpop.f32.mrf.mxu0
    %v127 = vadd.f32 %v107, %v126
    %128 = vmatmul.f32.gmra.mxu0 %v72
    %v129 = vpop.f32.mrf.mxu0
    %v130 = vadd.f32 %v107, %v129
    %131 = vdwg.mxu0
    %132 = vst [vmem:[#allocation8] sm:$0xff] %v127
    %133 = vst [vmem:[#allocation8 + $0x8] sm:$0xff] %v130
    %v134 = vld [vmem:[%s4] sm:$0x1]
    %v136 = vperm.slane %v134, 0
    %138 = vmatpush.msra.mxu0 %v104
    %139 = vmatpush.msra.mxu0 %v103
    %140 = vmatpush.msra.mxu0 %v102
    %141 = vmatpush.msra.mxu0 %v101
    %142 = vmatpush.msra.mxu0 %v100
    %143 = vmatpush.msra.mxu0 %v99
    %144 = vmatpush.msra.mxu0 %v98
    %145 = vmatpush.msra.mxu0 %v97
    %146 = vmatpush.msra.mxu0 %v96
    %147 = vmatpush.msra.mxu0 %v95
    %148 = vmatpush.msra.mxu0 %v94
    %149 = vmatpush.msra.mxu0 %v93
    %150 = vmatpush.msra.mxu0 %v92
    %151 = vmatpush.msra.mxu0 %v91
    %152 = vmatpush.msra.mxu0 %v90
    %153 = vmatpush.msra.mxu0 %v89
    %154 = vmatmul.f32.gmra.mxu0 %v71
    %v155 = vpop.f32.mrf.mxu0
    %v156 = vadd.f32 %v136, %v155
    %157 = vmatmul.f32.gmra.mxu0 %v72
    %v158 = vpop.f32.mrf.mxu0
    %v159 = vadd.f32 %v136, %v158
    %160 = vdwg.mxu0
    %161 = vst [vmem:[#allocation9] sm:$0xff] %v156
    %162 = vst [vmem:[#allocation9 + $0x8] sm:$0xff] %v159
    // Predicated region
    $region34: #{tpu_custom_call.1} parent=1 // pred_check
      _
    $region35: #{tpu_custom_call.1} parent=1 // pred_check_branch
      %164 = sbr.rel (0) target = $region37
    $region36: #{tpu_custom_call.1} parent=1 // pred_region
      %166 = vsyncadd [#allocation4], 0
      %s167 = sshll.u32 [#allocation8], 4
      %s168 = int_to_ptr.vmem [resolvable:$true] %s167
      %s169 = sshll.u32 %s5, 4
      %s170 = int_to_ptr.hbm [resolvable:$true] %s169
      %175 = dma.vmem_to_hbm [thread:$0]  %s168, 256, %s170, [#allocation4], 128, 128, 8
    $region37: #{tpu_custom_call.1} parent=1 // pred_fallthru
      _
    // Predicated region
    $region38: #{tpu_custom_call.1} parent=1 // pred_check
      _
    $region39: #{tpu_custom_call.1} parent=1 // pred_check_branch
      %177 = sbr.rel (0) target = $region41
    $region40: #{tpu_custom_call.1} parent=1 // pred_region
      %179 = vsyncadd [#allocation10], 0
      %s180 = sshll.u32 [#allocation9], 4
      %s181 = int_to_ptr.vmem [resolvable:$true] %s180
      %s182 = sshll.u32 %s6, 4
      %s183 = int_to_ptr.hbm [resolvable:$true] %s182
      %188 = dma.vmem_to_hbm [thread:$0]  %s181, 256, %s183, [#allocation10], 128, 128, 8
    $region41: #{tpu_custom_call.1} parent=1 // pred_fallthru
      _
    // Predicated region
    $region42: #{tpu_custom_call.1} parent=1 // pred_check
      _
    $region43: #{tpu_custom_call.1} parent=1 // pred_check_branch
      %190 = sbr.rel (0) target = $region45
    $region44: #{tpu_custom_call.1} parent=1 // pred_region
      %192 = dma.done [#allocation4], 256
    $region45: #{tpu_custom_call.1} parent=1 // pred_fallthru
      _
    // Predicated region
    $region46: #{tpu_custom_call.1} parent=1 // pred_check
      _
    $region47: #{tpu_custom_call.1} parent=1 // pred_check_branch
      %194 = sbr.rel (0) target = $region49
    $region48: #{tpu_custom_call.1} parent=1 // pred_region
      %196 = dma.done [#allocation10], 256
    $region49: #{tpu_custom_call.1} parent=1 // pred_fallthru
      _
    %197 = vsyncpa [#allocation3], 1
    %198 = vsyncpa [#allocation6], 1
    %199 = vsyncpa [#allocation4], 1
    %200 = vsyncpa [#allocation10], 1

</llo_original>
